<compile_context>
chip_gen: v7x
topology: tpu7x:2x2x1
jax: 0.10.0
libtpu: 0.0.40
codegen_flags: <defaults>
</compile_context>

<pallas_src>
import jax
import jax.numpy as jnp
from jax.experimental import pallas as pl
from jax.experimental.pallas import tpu as pltpu

_LANES = 128      # vreg lane count: the weight's class axis is padded to this
_TM_ALIGN = 128   # row-tile alignment (safe sublane multiple for f32 and bf16)


def _round_up(x, m):
    return (x + m - 1) // m * m


def _seg_head_kernel(feat_ref, w_ref, b_ref, out_ref):
    # feat_ref: [tm, C]      native dtype (f32); cast to bf16 on the VPU
    # w_ref:    [C, NC_pad]  bf16, lane-dense, resident across the grid
    # b_ref:    [1, NC_pad]  f32
    # out_ref:  [tm, NC]     f32, unpadded class axis, written once
    nc = out_ref.shape[-1]
    feat = feat_ref[...].astype(w_ref.dtype)
    logits = jnp.dot(feat, w_ref[...], preferred_element_type=jnp.float32)
    logits = logits + b_ref[...]
    out_ref[...] = logits[:, :nc].astype(out_ref.dtype)


def prepare_seg_head_params(weight, bias, *, compute_dtype=jnp.bfloat16):
    """Pad / transpose the nn.Linear params ONCE at init (not per call).

    weight: [num_classes, C] (PyTorch layout), bias: [num_classes].
    Returns (w_t [C, nc_pad] compute_dtype, b_pad [1, nc_pad] f32, num_classes).
    Padded lanes are zero, so they never leak into the unpadded output slice.
    """
    num_classes, c = weight.shape
    nc_pad = _round_up(num_classes, _LANES)
    w_t = jnp.zeros((c, nc_pad), compute_dtype)
    w_t = w_t.at[:, :num_classes].set(weight.T.astype(compute_dtype))
    b_pad = jnp.zeros((1, nc_pad), jnp.float32)
    b_pad = b_pad.at[:, :num_classes].set(bias.astype(jnp.float32))
    return w_t, b_pad, num_classes


def _per_row_vmem_bytes(c, num_classes, nc_pad, feat_bytes, w_bytes, out_bytes):
    # Double-buffered pipeline tiles (feat in, logits out) plus single-buffered
    # in-kernel intermediates (bf16 feat copy, padded f32 logits, sliced store).
    return (2 * (c * feat_bytes + num_classes * out_bytes)
            + c * w_bytes + nc_pad * 4 + num_classes * 4)


def _pick_tm(n, c, num_classes, nc_pad, feat_bytes, w_bytes, out_bytes, *,
             tm_max=8192, vmem_budget=24 << 20):
    """Largest 128-aligned row tile whose footprint fits `vmem_budget`
    (<= 24 MiB keeps headroom on v7x's 64 MiB-per-TC VMEM; the budget is made
    explicit downstream via vmem_limit_bytes so v5e's 16 MiB scoped default is
    irrelevant), capped so the parallel row grid has >= 8 steps when possible
    (>= 4 pipelined, balanced steps per TensorCore on v7x megacore)."""
    resident = 2 * (c * nc_pad * w_bytes + nc_pad * 4)     # weight + bias bufs
    per_row = _per_row_vmem_bytes(c, num_classes, nc_pad,
                                  feat_bytes, w_bytes, out_bytes)
    cap = max(_TM_ALIGN, (vmem_budget - resident) // per_row)
    eighth = _round_up(pl.cdiv(n, 8), _TM_ALIGN)           # >= 8 grid steps
    tm = min(tm_max, cap, eighth)
    return max(_TM_ALIGN, (tm // _TM_ALIGN) * _TM_ALIGN)


def seg_head_linear_prepared(feat, w_t, b_pad, num_classes, *, tm=None,
                             out_dtype=None):
    """seg_logits = feat @ weight.T + bias with pre-prepared (padded) params.

    feat: [N, C]; w_t: [C, nc_pad]; b_pad: [1, nc_pad]; returns [N, num_classes].
    """
    n, c = feat.shape
    c_w, nc_pad = w_t.shape
    assert c == c_w, "weight in_features must match feat channels"
    if out_dtype is None:
        out_dtype = feat.dtype

    feat_bytes = jnp.dtype(feat.dtype).itemsize
    w_bytes = jnp.dtype(w_t.dtype).itemsize
    out_bytes = jnp.dtype(out_dtype).itemsize

    if tm is None:
        tm = _pick_tm(n, c, num_classes, nc_pad,
                      feat_bytes, w_bytes, out_bytes)
    else:
        # 128-aligned: satisfies every dtype's min sublane tile (f32 8, bf16 16).
        tm = _round_up(tm, _TM_ALIGN)
    grid = (pl.cdiv(n, tm),)

    # Explicit scoped-VMEM limit: tile buffers + resident params + in-kernel
    # intermediates + Mosaic internal-scratch headroom. With the 24 MiB budget
    # this stays <= 32 MiB, well under every generation's physical VMEM
    # (v7x: 64 MiB per TC) and independent of the XLA default (v5e: 16 MiB).
    footprint = (tm * _per_row_vmem_bytes(c, num_classes, nc_pad,
                                          feat_bytes, w_bytes, out_bytes)
                 + 2 * (c * nc_pad * w_bytes + nc_pad * 4))
    vmem_limit = int(min(footprint + (8 << 20), 48 << 20))

    cost = pl.CostEstimate(
        flops=2 * n * c * nc_pad,                       # padded matmul actually run
        transcendentals=0,
        bytes_accessed=(n * c * feat_bytes              # feat read (native dtype)
                        + n * num_classes * out_bytes   # unpadded logits write
                        + c * nc_pad * w_bytes          # resident weight read
                        + nc_pad * 4),                  # resident bias read
    )

    return pl.pallas_call(
        _seg_head_kernel,
        out_shape=jax.ShapeDtypeStruct((n, num_classes), out_dtype),
        grid_spec=pltpu.PrefetchScalarGridSpec(
            num_scalar_prefetch=0,
            grid=grid,
            in_specs=[
                pl.BlockSpec((tm, c), lambda i: (i, 0)),
                pl.BlockSpec((c, nc_pad), lambda i: (0, 0)),
                pl.BlockSpec((1, nc_pad), lambda i: (0, 0)),
            ],
            # Last dim equals the full array dim -> legal narrow output block;
            # the masked store is VMEM-side and the HBM write is unpadded.
            out_specs=pl.BlockSpec((tm, num_classes), lambda i: (i, 0)),
        ),
        compiler_params=pltpu.CompilerParams(
            dimension_semantics=("parallel",),   # megacore sharding on v7x
            vmem_limit_bytes=vmem_limit,
        ),
        cost_estimate=cost,
    )(feat, w_t, b_pad)


def seg_head_linear(feat, weight, bias, *, tm=None, out_dtype=None):
    """Convenience wrapper matching nn.Linear: pads params then runs the kernel.
    Prefer prepare_seg_head_params() once at init + seg_head_linear_prepared()
    on the hot path."""
    w_t, b_pad, num_classes = prepare_seg_head_params(weight, bias)
    return seg_head_linear_prepared(feat, w_t, b_pad, num_classes,
                                    tm=tm, out_dtype=out_dtype)


def default_segmentor_v2_forward(input_dict, params):
    """Inference forward of DefaultSegmentorV2 (no criteria / no 'segment')."""
    feat = input_dict["feat"]  # TODO(synk): backbone treated as identity.
    seg_logits = seg_head_linear_prepared(
        feat, params["w_t"], params["b_pad"], params["num_classes"])
    return {"seg_logits": seg_logits}


if __name__ == "__main__":
    # Small shapes consistent with the module; N is deliberately NOT a tile
    # multiple to exercise the ragged-tail (cdiv grid) path.
    N, C, NUM_CLASSES = 1000, 64, 13

    key = jax.random.PRNGKey(0)
    k_feat, k_w, k_b = jax.random.split(key, 3)

    feat = jax.random.normal(k_feat, (N, C), dtype=jnp.float32)

    # Deterministic nn.Linear-style init: U(-1/sqrt(C), 1/sqrt(C))
    bound = 1.0 / jnp.sqrt(jnp.float32(C))
    w = jax.random.uniform(k_w, (NUM_CLASSES, C), jnp.float32, -bound, bound)
    b = jax.random.uniform(k_b, (NUM_CLASSES,), jnp.float32, -bound, bound)

    # Parameters are padded / transposed ONCE here (init time), not per call.
    w_t, b_pad, nc = prepare_seg_head_params(w, b)
    params = {"w_t": w_t, "b_pad": b_pad, "num_classes": nc}
    input_dict = {"feat": feat}

    out = default_segmentor_v2_forward(input_dict, params)
    seg_logits = jax.block_until_ready(out["seg_logits"])

    assert seg_logits.shape == (N, NUM_CLASSES)
    assert seg_logits.dtype == jnp.float32

    # Reference mirroring the kernel's bf16-input / f32-accumulate MXU path.
    ref_bf16 = (jnp.dot(feat.astype(jnp.bfloat16), w.T.astype(jnp.bfloat16),
                        preferred_element_type=jnp.float32) + b)
    assert jnp.allclose(seg_logits, ref_bf16, atol=1e-2, rtol=1e-2)

    # Full-precision nn.Linear reference (loose tolerance for bf16 inputs).
    ref_f32 = feat @ w.T + b
    assert jnp.allclose(seg_logits, ref_f32, atol=5e-2, rtol=5e-2)

    print("KERNEL_OK")
</pallas_src>

<mosaic_0001>
module attributes {stable_mosaic.version = 11 : i64} {
  func.func @_seg_head_kernel(%arg0: i32, %arg1: memref<128x64xf32, #tpu.memory_space<vmem>>, %arg2: memref<64x128xbf16, #tpu.memory_space<vmem>>, %arg3: memref<1x128xf32, #tpu.memory_space<vmem>>, %arg4: memref<128x13xf32, #tpu.memory_space<vmem>>) attributes {dimension_semantics = [#tpu.dimension_semantics<parallel>], iteration_bounds = array<i64: 8>, scalar_prefetch = 0 : i64, scratch_operands = 0 : i64, tpu.core_type = #tpu.core_type<tc>, window_params = [{transform_indices = @transform_0, window_bounds = array<i64: 128, 64>}, {pipeline_mode = #tpu.pipeline_mode<synchronous>, transform_indices = @transform_1, window_bounds = array<i64: 64, 128>}, {pipeline_mode = #tpu.pipeline_mode<synchronous>, transform_indices = @transform_2, window_bounds = array<i64: 1, 128>}, {transform_indices = @transform_3, window_bounds = array<i64: 128, 13>}]} {
    %c0 = arith.constant 0 : index
    %c0_0 = arith.constant 0 : index
    %0 = vector.load %arg1[%c0, %c0_0] : memref<128x64xf32, #tpu.memory_space<vmem>>, vector<128x64xf32>
    %1 = arith.truncf %0 : vector<128x64xf32> to vector<128x64xbf16>
    %c0_1 = arith.constant 0 : index
    %c0_2 = arith.constant 0 : index
    %2 = vector.load %arg2[%c0_1, %c0_2] : memref<64x128xbf16, #tpu.memory_space<vmem>>, vector<64x128xbf16>
    %cst = arith.constant dense<0.000000e+00> : vector<128x128xf32>
    %3 = tpu.matmul %1, %2, %cst {dimension_numbers = #tpu.dot_dimension_numbers<[1], [0], [0], [1], [0, 0, 1, 1], [], []>} : vector<128x64xbf16>, vector<64x128xbf16>, vector<128x128xf32> -> vector<128x128xf32>
    %c0_3 = arith.constant 0 : index
    %c0_4 = arith.constant 0 : index
    %4 = vector.load %arg3[%c0_3, %c0_4] : memref<1x128xf32, #tpu.memory_space<vmem>>, vector<1x128xf32>
    %5 = vector.broadcast %4 : vector<1x128xf32> to vector<128x128xf32>
    %6 = arith.addf %3, %5 : vector<128x128xf32>
    %7 = vector.extract_strided_slice %6 {offsets = [0, 0], sizes = [128, 13], strides = [1, 1]} : vector<128x128xf32> to vector<128x13xf32>
    %c0_5 = arith.constant 0 : index
    %c0_6 = arith.constant 0 : index
    %8 = vector.load %arg4[%c0_5, %c0_6] : memref<128x13xf32, #tpu.memory_space<vmem>>, vector<128x13xf32>
    tpu.vector_store %arg4[%c0_5, %c0_6], %7 {strides = array<i32>} : memref<128x13xf32, #tpu.memory_space<vmem>>, vector<128x13xf32>,
    return
  }
  func.func @transform_0(%arg0: i32) -> (i32, i32) {
    %c0_i32 = arith.constant 0 : i32
    %c0_i32_0 = arith.constant 0 : i32
    return %arg0, %c0_i32 : i32, i32
  }
  func.func @transform_1(%arg0: i32) -> (i32, i32) {
    %c0_i32 = arith.constant 0 : i32
    %c0_i32_0 = arith.constant 0 : i32
    %c0_i32_1 = arith.constant 0 : i32
    return %c0_i32, %c0_i32_0 : i32, i32
  }
  func.func @transform_2(%arg0: i32) -> (i32, i32) {
    %c0_i32 = arith.constant 0 : i32
    %c0_i32_0 = arith.constant 0 : i32
    %c0_i32_1 = arith.constant 0 : i32
    return %c0_i32, %c0_i32_0 : i32, i32
  }
  func.func @transform_3(%arg0: i32) -> (i32, i32) {
    %c0_i32 = arith.constant 0 : i32
    %c0_i32_0 = arith.constant 0 : i32
    return %arg0, %c0_i32 : i32, i32
  }
}

</mosaic_0001>

<llo_original>
// kernel: tpu_custom_call.1
$region0: #{tpu_custom_call.1}
  #allocation0 [shape = 'u32[]', space=smem, size = 0x4, offset = 0x4, fixed_abs, tag = 'smem constant byte address 0x4 - core index']
  #allocation1 [shape = 'u32[144,128]{1,0:T(1,128)}', space=vmem, size = 0x12000, scoped, tag = 'internal scratch']
  %s0 = inlined_call_operand.vmem [shape: f32[1000,64], index: 0, kind: input, shape index: {}]
  %s1 = inlined_call_operand.vmem [shape: bf16[64,128], index: 1, kind: input, shape index: {}]
  %s2 = inlined_call_operand.vmem [shape: f32[1,128], index: 2, kind: input, shape index: {}]
  %s3 = inlined_call_operand.vmem [shape: f32[1000,13], index: 3, kind: output, shape index: {}]
  %s4 = sld [smem:[#allocation0]]
  $region93: #{tpu_custom_call.1} parent=0
    _
  %s6 = ssub.s32 1, %s4
  %s7 = scalar_select 0, %s6, %s4
  $region1: #{tpu_custom_call.1} parent=0
    #allocation2 [shape = 'u8[131072]{0}', space=vmem, size = 0x20000, scoped, tag = 'output window, operand 0']
    loop: start=0, step=1, limit=10
    $region2: #{tpu_custom_call.1} parent=1 // loop_pre_header
      _
    $region3: #{tpu_custom_call.1} parent=1 // loop_header
      %s9 = sphi 0, %s13
      %p10 = scmp.ge.s32.totalorder %s9, 10
      %s19 = sphi 0, %s21
      %s22 = sphi 0, %s19
      %s23 = sphi 0, %s22
      %s39 = sphi 0, %s23
      %s43 = sphi 0, %s43
      %s45 = sphi 0, %s43
      %s46 = sphi 0, %s45
      %s60 = sphi 0, %s46
      %s64 = sphi 0, %s64
      %s66 = sphi 0, %s64
      %s67 = sphi 0, %s66
      %s81 = sphi 0, %s67
      %s87 = sphi 0, %s89
      %s90 = sphi 0, %s87
      %s91 = sphi 0, %s90
      %s107 = sphi 0, %s91
    $region4: #{tpu_custom_call.1} parent=1 // loop_header_branch
      %12 = sbr.rel (%p10) target = $region8
    $region5: #{tpu_custom_call.1} parent=1 // loop_body
      %s14 = ssub.s32 %s9, 1
      %s15 = ssub.s32 %s9, 2
      %s16 = sadd.s32 %s9, 1
      %s17 = ssub.s32 %s9, %s16
      %p18 = scmp.eq.s32.totalorder %s17, 0
      %s20 = sadd.s32 %s19, 1
      %s21 = scalar_select %p18, %s19, %s20
      %p24 = pneg %p18
      %p25 = scmp.eq.s32.totalorder %s9, 7
      %p26 = por %p24, %p25
      %p27 = scmp.ne.s32.totalorder %s19, %s22
      %p28 = scmp.eq.s32.totalorder %s9, 0
      %p29 = por %p27, %p28
      %p30 = scmp.ne.s32.totalorder %s19, %s22
      %p31 = scmp.eq.s32.totalorder %s14, 7
      %p32 = por %p30, %p31
      %p33 = scmp.ne.s32.totalorder %s22, %s23
      %p34 = scmp.eq.s32.totalorder %s14, 0
      %p35 = por %p33, %p34
      %p36 = scmp.ne.s32.totalorder %s22, %s23
      %p37 = scmp.eq.s32.totalorder %s15, 7
      %p38 = por %p36, %p37
      %p40 = scmp.ne.s32.totalorder %s23, %s39
      %p41 = scmp.eq.s32.totalorder %s15, 0
      %p42 = por %p40, %p41
      %s44 = sadd.s32 %s43, 1
      %p47 = scmp.eq.s32.totalorder %s9, 7
      %p48 = scmp.ne.s32.totalorder %s43, %s45
      %p49 = scmp.eq.s32.totalorder %s9, 0
      %p50 = por %p48, %p49
      %p51 = scmp.ne.s32.totalorder %s43, %s45
      %p52 = scmp.eq.s32.totalorder %s14, 7
      %p53 = por %p51, %p52
      %p54 = scmp.ne.s32.totalorder %s45, %s46
      %p55 = scmp.eq.s32.totalorder %s14, 0
      %p56 = por %p54, %p55
      %p57 = scmp.ne.s32.totalorder %s45, %s46
      %p58 = scmp.eq.s32.totalorder %s15, 7
      %p59 = por %p57, %p58
      %p61 = scmp.ne.s32.totalorder %s46, %s60
      %p62 = scmp.eq.s32.totalorder %s15, 0
      %p63 = por %p61, %p62
      %s65 = sadd.s32 %s64, 1
      %p68 = scmp.eq.s32.totalorder %s9, 7
      %p69 = scmp.ne.s32.totalorder %s64, %s66
      %p70 = scmp.eq.s32.totalorder %s9, 0
      %p71 = por %p69, %p70
      %p72 = scmp.ne.s32.totalorder %s64, %s66
      %p73 = scmp.eq.s32.totalorder %s14, 7
      %p74 = por %p72, %p73
      %p75 = scmp.ne.s32.totalorder %s66, %s67
      %p76 = scmp.eq.s32.totalorder %s14, 0
      %p77 = por %p75, %p76
      %p78 = scmp.ne.s32.totalorder %s66, %s67
      %p79 = scmp.eq.s32.totalorder %s15, 7
      %p80 = por %p78, %p79
      %p82 = scmp.ne.s32.totalorder %s67, %s81
      %p83 = scmp.eq.s32.totalorder %s15, 0
      %p84 = por %p82, %p83
      %s85 = ssub.s32 %s9, %s16
      %p86 = scmp.eq.s32.totalorder %s85, 0
      %s88 = sadd.s32 %s87, 1
      %s89 = scalar_select %p86, %s87, %s88
      %p92 = pneg %p86
      %p93 = scmp.eq.s32.totalorder %s9, 7
      %p94 = por %p92, %p93
      %p95 = scmp.ne.s32.totalorder %s87, %s90
      %p96 = scmp.eq.s32.totalorder %s9, 0
      %p97 = por %p95, %p96
      %p98 = scmp.ne.s32.totalorder %s87, %s90
      %p99 = scmp.eq.s32.totalorder %s14, 7
      %p100 = por %p98, %p99
      %p101 = scmp.ne.s32.totalorder %s90, %s91
      %p102 = scmp.eq.s32.totalorder %s14, 0
      %p103 = por %p101, %p102
      %p104 = scmp.ne.s32.totalorder %s90, %s91
      %p105 = scmp.eq.s32.totalorder %s15, 7
      %p106 = por %p104, %p105
      %p108 = scmp.ne.s32.totalorder %s91, %s107
      %p109 = scmp.eq.s32.totalorder %s15, 0
      %p110 = por %p108, %p109
      %p111 = scmp.le.s32.totalorder 1, %s9
      %p112 = scmp.lt.s32.totalorder %s9, 9
      %p113 = pnand %p111, %p112
      %p114 = pneg %p113
      // Predicated region
      $region9: #{tpu_custom_call.1} parent=5 // pred_check
        _
      $region10: #{tpu_custom_call.1} parent=5 // pred_check_branch
        %116 = sbr.rel (%p113) target = $region12
      $region11: #{tpu_custom_call.1} parent=5 // pred_region
        %s117 = ssub.s32 %s9, 1
        // Predicated region
        $region13: #{tpu_custom_call.1} parent=11 // pred_check
          %p118 = pneg %p56
        $region14: #{tpu_custom_call.1} parent=11 // pred_check_branch
          %120 = sbr.rel (%p118) target = $region16
        $region15: #{tpu_custom_call.1} parent=11 // pred_region
          _
        $region16: #{tpu_custom_call.1} parent=11 // pred_fallthru
          _
        // Predicated region
        $region17: #{tpu_custom_call.1} parent=11 // pred_check
          %p121 = pneg %p77
        $region18: #{tpu_custom_call.1} parent=11 // pred_check_branch
          %123 = sbr.rel (%p121) target = $region20
        $region19: #{tpu_custom_call.1} parent=11 // pred_region
          _
        $region20: #{tpu_custom_call.1} parent=11 // pred_fallthru
          _
      $region12: #{tpu_custom_call.1} parent=5 // pred_fallthru
        _
      %p124 = scmp.lt.s32.totalorder %s9, 8
      // Predicated region
      $region21: #{tpu_custom_call.1} parent=5 // pred_check
        %p125 = pneg %p124
      $region22: #{tpu_custom_call.1} parent=5 // pred_check_branch
        %127 = sbr.rel (%p125) target = $region24
      $region23: #{tpu_custom_call.1} parent=5 // pred_region
        // Predicated region
        $region25: #{tpu_custom_call.1} parent=23 // pred_check
          %p128 = pneg %p29
        $region26: #{tpu_custom_call.1} parent=23 // pred_check_branch
          %130 = sbr.rel (%p128) target = $region28
        $region27: #{tpu_custom_call.1} parent=23 // pred_region
          %s131 = smul.u32 16, %s9
          %s132 = ssub.s32 125, %s131
          %p133 = scmp.lt.s32.totalorder %s132, 16
          %s134 = scalar_select %p133, %s132, 16
          %s135 = smul.u32 128, %s134
          %p136 = scmp.lt.s32.totalorder %s131, 124
          %s137 = scalar_select %p136, %s131, 124
          %s138 = smul.addr %s137, 8
          %s139 = scalar_lea.vmem %s0, %s138
          %s140 = smul.u32 16, %s9
          %s141 = ssub.s32 125, %s140
          %p142 = scmp.lt.s32.totalorder %s141, 16
          %s143 = scalar_select %p142, %s141, 16
          %s144 = smul.u32 128, %s143
        $region28: #{tpu_custom_call.1} parent=23 // pred_fallthru
          _
      $region24: #{tpu_custom_call.1} parent=5 // pred_fallthru
        _
      %p145 = scmp.le.s32.totalorder 1, %s9
      %p146 = scmp.lt.s32.totalorder %s9, 9
      %p147 = pnand %p145, %p146
      %p148 = pneg %p147
      // Predicated region
      $region29: #{tpu_custom_call.1} parent=5 // pred_check
        _
      $region30: #{tpu_custom_call.1} parent=5 // pred_check_branch
        %150 = sbr.rel (%p147) target = $region32
      $region31: #{tpu_custom_call.1} parent=5 // pred_region
        %s151 = ssub.s32 %s9, 1
        %s152 = smul.u32 16, %s14
        %s153 = ssub.s32 125, %s152
        %p154 = scmp.lt.s32.totalorder %s153, 16
        %s155 = scalar_select %p154, %s153, 16
        %s156 = smul.u32 128, %s155
        %p157 = scmp.lt.s32.totalorder %s152, 124
        %s158 = scalar_select %p157, %s152, 124
        %s159 = smul.addr %s158, 8
        %s160 = scalar_lea.vmem %s0, %s159
        %p161 = pneg %p35
        %p162 = pneg %p32
        %p163 = pneg %p56
        %p164 = pneg %p53
        %p165 = pneg %p77
        %p166 = pneg %p74
        %p167 = pneg %p103
        %p168 = pneg %p100
        %s169 = sand.u32 %s90, 1
        %s170 = sand.u32 %s90, 1
        %s171 = smul.addr %s170, 128
        %s172 = scalar_lea.vmem [#allocation2], %s171
        %s173 = smul.u32 16, %s14
        %s174 = ssub.s32 125, %s173
        %p175 = scmp.lt.s32.totalorder %s174, 16
        %s176 = scalar_select %p175, %s174, 16
        %s177 = smul.u32 128, %s176
        %p178 = scmp.lt.s32.totalorder %s173, 124
        %s179 = scalar_select %p178, %s173, 124
        %s180 = smul.addr %s179, 8
        %s181 = scalar_lea.vmem %s0, %s180
        %s182 = smul.u32 16, %s14
        %s183 = ssub.s32 125, %s182
        %p184 = scmp.lt.s32.totalorder %s183, 16
        %s185 = scalar_select %p184, %s183, 16
        %s186 = smul.u32 128, %s185
        %s187 = smul.u32 16, %s14
        %s188 = ssub.s32 125, %s187
        %p189 = scmp.lt.s32.totalorder %s188, 16
        %s190 = scalar_select %p189, %s188, 16
        %s191 = smul.u32 128, %s190
        %v193 = vld [vmem:[%s181] sm:$0xff]
        %v194 = vld [vmem:[%s181 + $0x8] sm:$0xff]
        %v195 = vld [vmem:[%s181 + $0x10] sm:$0xff]
        %v196 = vld [vmem:[%s181 + $0x18] sm:$0xff]
        %v197 = vld [vmem:[%s181 + $0x20] sm:$0xff]
        %v198 = vld [vmem:[%s181 + $0x28] sm:$0xff]
        %v199 = vld [vmem:[%s181 + $0x30] sm:$0xff]
        %v200 = vld [vmem:[%s181 + $0x38] sm:$0xff]
        %v201 = vld [vmem:[%s181 + $0x40] sm:$0xff]
        %v202 = vld [vmem:[%s181 + $0x48] sm:$0xff]
        %v203 = vld [vmem:[%s181 + $0x50] sm:$0xff]
        %v204 = vld [vmem:[%s181 + $0x58] sm:$0xff]
        %v205 = vld [vmem:[%s181 + $0x60] sm:$0xff]
        %v206 = vld [vmem:[%s181 + $0x68] sm:$0xff]
        %v207 = vld [vmem:[%s181 + $0x70] sm:$0xff]
        %v208 = vld [vmem:[%s181 + $0x78] sm:$0xff]
        %v209 = vpack.c.bf16 %v194, %v193
        %v210 = vpack.c.bf16 %v196, %v195
        %v211 = vpack.c.bf16 %v198, %v197
        %v212 = vpack.c.bf16 %v200, %v199
        %v213 = vpack.c.bf16 %v202, %v201
        %v214 = vpack.c.bf16 %v204, %v203
        %v215 = vpack.c.bf16 %v206, %v205
        %v216 = vpack.c.bf16 %v208, %v207
        %v217 = vld [vmem:[%s1] sm:$0xf]
        %v218 = vld [vmem:[%s1 + $0x4] sm:$0xf]
        %v219 = vld [vmem:[%s1 + $0x8] sm:$0xf]
        %v220 = vld [vmem:[%s1 + $0xc] sm:$0xf]
        %v221 = vld [vmem:[%s1 + $0x10] sm:$0xf]
        %v222 = vld [vmem:[%s1 + $0x14] sm:$0xf]
        %v223 = vld [vmem:[%s1 + $0x18] sm:$0xf]
        %v224 = vld [vmem:[%s1 + $0x1c] sm:$0xf]
        %v225 = vld [vmem:[%s2] sm:$0x1]
        %v227 = vlaneseq
        %v228 = vshrl.u32 %v227, 7
        %v229 = vsub.s32 0, %v228
        %v230 = vrot.slane %v225, %v229
        %v240 = vunpack.c.l.b16 %v217
        %v241 = vunpack.c.l.b16 %v218
        %v242 = vunpack.c.l.b16 %v219
        %v243 = vunpack.c.l.b16 %v220
        %v244 = vunpack.c.l.b16 %v221
        %v245 = vunpack.c.l.b16 %v222
        %v246 = vunpack.c.l.b16 %v223
        %v247 = vunpack.c.l.b16 %v224
        %v248 = vpack.c.b16 %v241, %v240
        %v249 = vpack.c.b16 %v243, %v242
        %v250 = vpack.c.b16 %v245, %v244
        %v251 = vpack.c.b16 %v247, %v246
        %vm256 = vcmask 523264
        %v258 = vsel %vm256, %v209, 0
        %v261 = vsel %vm256, %v210, 0
        %v264 = vsel %vm256, %v211, 0
        %v267 = vsel %vm256, %v212, 0
        %v270 = vsel %vm256, %v213, 0
        %v273 = vsel %vm256, %v214, 0
        %v276 = vsel %vm256, %v215, 0
        %v279 = vsel %vm256, %v216, 0
        %281 = vmatprep.subr.bf16.mxu0 0
        %282 = vmatpush1.bf16.msra.mxu0 %v248
        %283 = vmatprep.subr.bf16.mxu0 0
        %284 = vmatpush1.bf16.msra.mxu0 %v249
        %285 = vmatprep.subr.bf16.mxu0 0
        %286 = vmatpush1.bf16.msra.mxu0 %v250
        %287 = vmatprep.subr.bf16.mxu0 0
        %288 = vmatpush1.bf16.msra.mxu0 %v251
        %289 = vmatprep.subr.bf16.mxu0 0
        %290 = vmatpush1.bf16.msra.mxu0 0
        %291 = vmatprep.subr.bf16.mxu0 0
        %292 = vmatpush1.bf16.msra.mxu0 0
        %293 = vmatprep.subr.bf16.mxu0 0
        %294 = vmatpush1.bf16.msra.mxu0 0
        %295 = vmatprep.subr.bf16.mxu0 0
        %296 = vmatpush1.bf16.msra.mxu0 0
        %297 = vmatprep.subr.bf16.mxu0 0
        %298 = vmatpush1.bf16.msra.mxu0 0
        %299 = vmatprep.subr.bf16.mxu0 0
        %300 = vmatpush1.bf16.msra.mxu0 0
        %301 = vmatprep.subr.bf16.mxu0 0
        %302 = vmatpush1.bf16.msra.mxu0 0
        %303 = vmatprep.subr.bf16.mxu0 0
        %304 = vmatpush1.bf16.msra.mxu0 0
        %305 = vmatprep.subr.bf16.mxu0 0
        %306 = vmatpush1.bf16.msra.mxu0 0
        %307 = vmatprep.subr.bf16.mxu0 0
        %308 = vmatpush1.bf16.msra.mxu0 0
        %309 = vmatprep.subr.bf16.mxu0 0
        %310 = vmatpush1.bf16.msra.mxu0 0
        %311 = vmatprep.subr.bf16.mxu0 0
        %312 = vmatpush1.bf16.msra.mxu0 0
        %313 = vmatprep.mubr.bf16.mxu0 0
        %314 = vmatmul.mubr.bf16.gmra.mrb[0].mxu0 %v258
        %v315 = vpop.f32.mrb[0].mxu0
        %v316 = vadd.f32 %v230, %v315
        %v317 = vpop.f32.mrb[0].mxu0
        %v318 = vpop.f32.mrb[0].mxu0
        %v319 = vadd.f32 %v230, %v318
        %v320 = vpop.f32.mrb[0].mxu0
        %321 = vmatprep.mubr.bf16.mxu0 0
        %322 = vmatmul.mubr.bf16.gmra.mrb[0].mxu0 %v261
        %v323 = vpop.f32.mrb[0].mxu0
        %v324 = vadd.f32 %v230, %v323
        %v325 = vpop.f32.mrb[0].mxu0
        %v326 = vpop.f32.mrb[0].mxu0
        %v327 = vadd.f32 %v230, %v326
        %v328 = vpop.f32.mrb[0].mxu0
        %329 = vmatprep.mubr.bf16.mxu0 0
        %330 = vmatmul.mubr.bf16.gmra.mrb[0].mxu0 %v264
        %v331 = vpop.f32.mrb[0].mxu0
        %v332 = vadd.f32 %v230, %v331
        %v333 = vpop.f32.mrb[0].mxu0
        %v334 = vpop.f32.mrb[0].mxu0
        %v335 = vadd.f32 %v230, %v334
        %v336 = vpop.f32.mrb[0].mxu0
        %337 = vmatprep.mubr.bf16.mxu0 0
        %338 = vmatmul.mubr.bf16.gmra.mrb[0].mxu0 %v267
        %v339 = vpop.f32.mrb[0].mxu0
        %v340 = vadd.f32 %v230, %v339
        %v341 = vpop.f32.mrb[0].mxu0
        %v342 = vpop.f32.mrb[0].mxu0
        %v343 = vadd.f32 %v230, %v342
        %v344 = vpop.f32.mrb[0].mxu0
        %345 = vmatprep.mubr.bf16.mxu0 0
        %346 = vmatmul.mubr.bf16.gmra.mrb[0].mxu0 %v270
        %v347 = vpop.f32.mrb[0].mxu0
        %v348 = vadd.f32 %v230, %v347
        %v349 = vpop.f32.mrb[0].mxu0
        %v350 = vpop.f32.mrb[0].mxu0
        %v351 = vadd.f32 %v230, %v350
        %v352 = vpop.f32.mrb[0].mxu0
        %353 = vmatprep.mubr.bf16.mxu0 0
        %354 = vmatmul.mubr.bf16.gmra.mrb[0].mxu0 %v273
        %v355 = vpop.f32.mrb[0].mxu0
        %v356 = vadd.f32 %v230, %v355
        %v357 = vpop.f32.mrb[0].mxu0
        %v358 = vpop.f32.mrb[0].mxu0
        %v359 = vadd.f32 %v230, %v358
        %v360 = vpop.f32.mrb[0].mxu0
        %361 = vmatprep.mubr.bf16.mxu0 0
        %362 = vmatmul.mubr.bf16.gmra.mrb[0].mxu0 %v276
        %v363 = vpop.f32.mrb[0].mxu0
        %v364 = vadd.f32 %v230, %v363
        %v365 = vpop.f32.mrb[0].mxu0
        %v366 = vpop.f32.mrb[0].mxu0
        %v367 = vadd.f32 %v230, %v366
        %v368 = vpop.f32.mrb[0].mxu0
        %369 = vmatprep.mubr.bf16.mxu0 0
        %370 = vmatmul.mubr.bf16.gmra.mrb[0].mxu0 %v279
        %v371 = vpop.f32.mrb[0].mxu0
        %v372 = vadd.f32 %v230, %v371
        %v373 = vpop.f32.mrb[0].mxu0
        %v374 = vpop.f32.mrb[0].mxu0
        %v375 = vadd.f32 %v230, %v374
        %v376 = vpop.f32.mrb[0].mxu0
        %377 = vdwg.mxu0
        %vm378 = vcmask 105472
        %379 = vst.msk [vmem:[%s172] sm:$0xff] %vm378, %v316
        %380 = vst.msk [vmem:[%s172 + $0x8] sm:$0xff] %vm378, %v319
        %381 = vst.msk [vmem:[%s172 + $0x10] sm:$0xff] %vm378, %v324
        %382 = vst.msk [vmem:[%s172 + $0x18] sm:$0xff] %vm378, %v327
        %383 = vst.msk [vmem:[%s172 + $0x20] sm:$0xff] %vm378, %v332
        %384 = vst.msk [vmem:[%s172 + $0x28] sm:$0xff] %vm378, %v335
        %385 = vst.msk [vmem:[%s172 + $0x30] sm:$0xff] %vm378, %v340
        %386 = vst.msk [vmem:[%s172 + $0x38] sm:$0xff] %vm378, %v343
        %387 = vst.msk [vmem:[%s172 + $0x40] sm:$0xff] %vm378, %v348
        %388 = vst.msk [vmem:[%s172 + $0x48] sm:$0xff] %vm378, %v351
        %389 = vst.msk [vmem:[%s172 + $0x50] sm:$0xff] %vm378, %v356
        %390 = vst.msk [vmem:[%s172 + $0x58] sm:$0xff] %vm378, %v359
        %391 = vst.msk [vmem:[%s172 + $0x60] sm:$0xff] %vm378, %v364
        %392 = vst.msk [vmem:[%s172 + $0x68] sm:$0xff] %vm378, %v367
        %393 = vst.msk [vmem:[%s172 + $0x70] sm:$0xff] %vm378, %v372
        %394 = vst.msk [vmem:[%s172 + $0x78] sm:$0xff] %vm378, %v375
        %s395 = sand.u32 %s90, 1
        %s396 = sand.u32 %s90, 1
        %s397 = smul.addr %s396, 128
        %s398 = scalar_lea.vmem [#allocation2], %s397
        // Predicated region
        $region33: #{tpu_custom_call.1} parent=31 // pred_check
          %p399 = pneg %p100
        $region34: #{tpu_custom_call.1} parent=31 // pred_check_branch
          %401 = sbr.rel (%p399) target = $region36
        $region35: #{tpu_custom_call.1} parent=31 // pred_region
          %s402 = smul.u32 16, %s14
          %s403 = ssub.s32 125, %s402
          %p404 = scmp.lt.s32.totalorder %s403, 16
          %s405 = scalar_select %p404, %s403, 16
          %s406 = smul.u32 128, %s405
          %p407 = scmp.ne.s32.totalorder 0, %s406
          %s408 = smul.addr %s402, 8
          %s409 = scalar_lea.vmem %s3, %s408
          // Predicated region
          $region37: #{tpu_custom_call.1} parent=35 // pred_check
            %p410 = pneg %p407
          $region38: #{tpu_custom_call.1} parent=35 // pred_check_branch
            %412 = sbr.rel (%p410) target = $region40
          $region39: #{tpu_custom_call.1} parent=35 // pred_region
            // Predicated region
            $region41: #{tpu_custom_call.1} parent=39 // pred_check
              _
            $region42: #{tpu_custom_call.1} parent=39 // pred_check_branch
              %414 = sbr.rel (0) target = $region44
            $region43: #{tpu_custom_call.1} parent=39 // pred_region
              // Predicated region
              $region63: #{tpu_custom_call.1} parent=43 // pred_check
                _
              $region64: #{tpu_custom_call.1} parent=43 // pred_check_branch
                %493 = sbr.rel (0) target = $region66
              $region65: #{tpu_custom_call.1} parent=43 // pred_region
                %s494 = sshrl.u32 %s405, 4
                // While loop
                $region67: #{tpu_custom_call.1} parent=65 // loop_pre_header
                  _
                $region68: #{tpu_custom_call.1} parent=65 // loop_header
                  %s496 = sphi 0, %s498
                  %p497 = scmp.ge.s32.totalorder %s496, %s494
                  %s501 = sphi 0, %s538
                  %s502 = sphi %s398, %s541
                  %s503 = sphi %s409, %s542
                $region69: #{tpu_custom_call.1} parent=65 // loop_header_branch
                  %500 = sbr.rel (%p497) target = $region73
                $region70: #{tpu_custom_call.1} parent=65 // loop_body
                  %v504 = vld [vmem:[%s502] sm:$0xff]
                  %505 = vst [vmem:[%s503] sm:$0xff] %v504
                  %v506 = vld [vmem:[%s502 + $0x8] sm:$0xff]
                  %507 = vst [vmem:[%s503 + $0x8] sm:$0xff] %v506
                  %v508 = vld [vmem:[%s502 + $0x10] sm:$0xff]
                  %509 = vst [vmem:[%s503 + $0x10] sm:$0xff] %v508
                  %v510 = vld [vmem:[%s502 + $0x18] sm:$0xff]
                  %511 = vst [vmem:[%s503 + $0x18] sm:$0xff] %v510
                  %v512 = vld [vmem:[%s502 + $0x20] sm:$0xff]
                  %513 = vst [vmem:[%s503 + $0x20] sm:$0xff] %v512
                  %v514 = vld [vmem:[%s502 + $0x28] sm:$0xff]
                  %515 = vst [vmem:[%s503 + $0x28] sm:$0xff] %v514
                  %v516 = vld [vmem:[%s502 + $0x30] sm:$0xff]
                  %517 = vst [vmem:[%s503 + $0x30] sm:$0xff] %v516
                  %v518 = vld [vmem:[%s502 + $0x38] sm:$0xff]
                  %519 = vst [vmem:[%s503 + $0x38] sm:$0xff] %v518
                  %v520 = vld [vmem:[%s502 + $0x40] sm:$0xff]
                  %521 = vst [vmem:[%s503 + $0x40] sm:$0xff] %v520
                  %v522 = vld [vmem:[%s502 + $0x48] sm:$0xff]
                  %523 = vst [vmem:[%s503 + $0x48] sm:$0xff] %v522
                  %v524 = vld [vmem:[%s502 + $0x50] sm:$0xff]
                  %525 = vst [vmem:[%s503 + $0x50] sm:$0xff] %v524
                  %v526 = vld [vmem:[%s502 + $0x58] sm:$0xff]
                  %527 = vst [vmem:[%s503 + $0x58] sm:$0xff] %v526
                  %v528 = vld [vmem:[%s502 + $0x60] sm:$0xff]
                  %529 = vst [vmem:[%s503 + $0x60] sm:$0xff] %v528
                  %v530 = vld [vmem:[%s502 + $0x68] sm:$0xff]
                  %531 = vst [vmem:[%s503 + $0x68] sm:$0xff] %v530
                  %v532 = vld [vmem:[%s502 + $0x70] sm:$0xff]
                  %533 = vst [vmem:[%s503 + $0x70] sm:$0xff] %v532
                  %v534 = vld [vmem:[%s502 + $0x78] sm:$0xff]
                  %535 = vst [vmem:[%s503 + $0x78] sm:$0xff] %v534
                  %s536 = sadd.s32 1, %s501
                  %p537 = scmp.ge.s32.totalorder %s536, %s494
                  %s538 = scalar_select %p537, 0, %s536
                  %s539 = smul.u32 %s538, 128
                  %s540 = smul.u32 %s538, 128
                  %s541 = scalar_lea.vmem %s398, %s539 [#allocation2]
                  %s542 = scalar_lea.vmem %s409, %s540
                $region71: #{tpu_custom_call.1} parent=65 // loop_footer
                  %s498 = sadd.s32 %s496, 1
                $region72: #{tpu_custom_call.1} parent=65 // loop_footer_branch
                  %495 = sbr.rel target = $region68
                $region73: #{tpu_custom_call.1} parent=65 // loop_exit
                  _
                %s543 = sshrl.u32 %s405, 4
                %s544 = sand.u32 %s405, 15
                %s545 = smul.u32 %s543, 16
                %s546 = smul.u32 8, %s545
                %s547 = scalar_lea.vmem %s398, %s546 [#allocation2]
                %s548 = smul.u32 8, %s545
                %s549 = scalar_lea.vmem %s409, %s548
                // While loop
                $region74: #{tpu_custom_call.1} parent=65 // loop_pre_header
                  _
                $region75: #{tpu_custom_call.1} parent=65 // loop_header
                  %s551 = sphi 0, %s553
                  %p552 = scmp.ge.s32.totalorder %s551, %s544
                  %s556 = sphi 0, %s563
                  %s557 = sphi %s547, %s566
                  %s558 = sphi %s549, %s567
                $region76: #{tpu_custom_call.1} parent=65 // loop_header_branch
                  %555 = sbr.rel (%p552) target = $region80
                $region77: #{tpu_custom_call.1} parent=65 // loop_body
                  %v559 = vld [vmem:[%s557] sm:$0xff]
                  %560 = vst [vmem:[%s558] sm:$0xff] %v559
                  %s561 = sadd.s32 1, %s556
                  %p562 = scmp.ge.s32.totalorder %s561, %s544
                  %s563 = scalar_select %p562, 0, %s561
                  %s564 = smul.u32 %s563, 8
                  %s565 = smul.u32 %s563, 8
                  %s566 = scalar_lea.vmem %s547, %s564 [#allocation2]
                  %s567 = scalar_lea.vmem %s549, %s565
                $region78: #{tpu_custom_call.1} parent=65 // loop_footer
                  %s553 = sadd.s32 %s551, 1
                $region79: #{tpu_custom_call.1} parent=65 // loop_footer_branch
                  %550 = sbr.rel target = $region75
                $region80: #{tpu_custom_call.1} parent=65 // loop_exit
                  _
              $region66: #{tpu_custom_call.1} parent=43 // pred_fallthru
                _
              // Predicated region
              $region81: #{tpu_custom_call.1} parent=43 // pred_check
                _
              $region82: #{tpu_custom_call.1} parent=43 // pred_check_branch
                %569 = sbr.rel target = $region84
              $region83: #{tpu_custom_call.1} parent=43 // pred_region
                _
              $region84: #{tpu_custom_call.1} parent=43 // pred_fallthru
                _
            $region44: #{tpu_custom_call.1} parent=39 // pred_fallthru
              _
            // Predicated region
            $region45: #{tpu_custom_call.1} parent=39 // pred_check
              _
            $region46: #{tpu_custom_call.1} parent=39 // pred_check_branch
              %416 = sbr.rel target = $region48
            $region47: #{tpu_custom_call.1} parent=39 // pred_region
              %s418 = sshrl.u32 %s405, 4
              // While loop
              $region49: #{tpu_custom_call.1} parent=47 // loop_pre_header
                _
              $region50: #{tpu_custom_call.1} parent=47 // loop_header
                %s420 = sphi 0, %s422
                %p421 = scmp.ge.s32.totalorder %s420, %s418
                %s425 = sphi 0, %s462
                %s426 = sphi %s398, %s465
                %s427 = sphi %s409, %s466
              $region51: #{tpu_custom_call.1} parent=47 // loop_header_branch
                %424 = sbr.rel (%p421) target = $region55
              $region52: #{tpu_custom_call.1} parent=47 // loop_body
                %v428 = vld [vmem:[%s426] sm:$0xff]
                %429 = vst [vmem:[%s427] sm:$0xff] %v428
                %v430 = vld [vmem:[%s426 + $0x8] sm:$0xff]
                %431 = vst [vmem:[%s427 + $0x8] sm:$0xff] %v430
                %v432 = vld [vmem:[%s426 + $0x10] sm:$0xff]
                %433 = vst [vmem:[%s427 + $0x10] sm:$0xff] %v432
                %v434 = vld [vmem:[%s426 + $0x18] sm:$0xff]
                %435 = vst [vmem:[%s427 + $0x18] sm:$0xff] %v434
                %v436 = vld [vmem:[%s426 + $0x20] sm:$0xff]
                %437 = vst [vmem:[%s427 + $0x20] sm:$0xff] %v436
                %v438 = vld [vmem:[%s426 + $0x28] sm:$0xff]
                %439 = vst [vmem:[%s427 + $0x28] sm:$0xff] %v438
                %v440 = vld [vmem:[%s426 + $0x30] sm:$0xff]
                %441 = vst [vmem:[%s427 + $0x30] sm:$0xff] %v440
                %v442 = vld [vmem:[%s426 + $0x38] sm:$0xff]
                %443 = vst [vmem:[%s427 + $0x38] sm:$0xff] %v442
                %v444 = vld [vmem:[%s426 + $0x40] sm:$0xff]
                %445 = vst [vmem:[%s427 + $0x40] sm:$0xff] %v444
                %v446 = vld [vmem:[%s426 + $0x48] sm:$0xff]
                %447 = vst [vmem:[%s427 + $0x48] sm:$0xff] %v446
                %v448 = vld [vmem:[%s426 + $0x50] sm:$0xff]
                %449 = vst [vmem:[%s427 + $0x50] sm:$0xff] %v448
                %v450 = vld [vmem:[%s426 + $0x58] sm:$0xff]
                %451 = vst [vmem:[%s427 + $0x58] sm:$0xff] %v450
                %v452 = vld [vmem:[%s426 + $0x60] sm:$0xff]
                %453 = vst [vmem:[%s427 + $0x60] sm:$0xff] %v452
                %v454 = vld [vmem:[%s426 + $0x68] sm:$0xff]
                %455 = vst [vmem:[%s427 + $0x68] sm:$0xff] %v454
                %v456 = vld [vmem:[%s426 + $0x70] sm:$0xff]
                %457 = vst [vmem:[%s427 + $0x70] sm:$0xff] %v456
                %v458 = vld [vmem:[%s426 + $0x78] sm:$0xff]
                %459 = vst [vmem:[%s427 + $0x78] sm:$0xff] %v458
                %s460 = sadd.s32 1, %s425
                %p461 = scmp.ge.s32.totalorder %s460, %s418
                %s462 = scalar_select %p461, 0, %s460
                %s463 = smul.u32 %s462, 128
                %s464 = smul.u32 %s462, 128
                %s465 = scalar_lea.vmem %s398, %s463 [#allocation2]
                %s466 = scalar_lea.vmem %s409, %s464
              $region53: #{tpu_custom_call.1} parent=47 // loop_footer
                %s422 = sadd.s32 %s420, 1
              $region54: #{tpu_custom_call.1} parent=47 // loop_footer_branch
                %419 = sbr.rel target = $region50
              $region55: #{tpu_custom_call.1} parent=47 // loop_exit
                _
              %s467 = sshrl.u32 %s405, 4
              %s468 = sand.u32 %s405, 15
              %s469 = smul.u32 %s467, 16
              %s470 = smul.u32 8, %s469
              %s471 = scalar_lea.vmem %s398, %s470 [#allocation2]
              %s472 = smul.u32 8, %s469
              %s473 = scalar_lea.vmem %s409, %s472
              // While loop
              $region56: #{tpu_custom_call.1} parent=47 // loop_pre_header
                _
              $region57: #{tpu_custom_call.1} parent=47 // loop_header
                %s475 = sphi 0, %s477
                %p476 = scmp.ge.s32.totalorder %s475, %s468
                %s480 = sphi 0, %s487
                %s481 = sphi %s471, %s490
                %s482 = sphi %s473, %s491
              $region58: #{tpu_custom_call.1} parent=47 // loop_header_branch
                %479 = sbr.rel (%p476) target = $region62
              $region59: #{tpu_custom_call.1} parent=47 // loop_body
                %v483 = vld [vmem:[%s481] sm:$0xff]
                %484 = vst [vmem:[%s482] sm:$0xff] %v483
                %s485 = sadd.s32 1, %s480
                %p486 = scmp.ge.s32.totalorder %s485, %s468
                %s487 = scalar_select %p486, 0, %s485
                %s488 = smul.u32 %s487, 8
                %s489 = smul.u32 %s487, 8
                %s490 = scalar_lea.vmem %s471, %s488 [#allocation2]
                %s491 = scalar_lea.vmem %s473, %s489
              $region60: #{tpu_custom_call.1} parent=47 // loop_footer
                %s477 = sadd.s32 %s475, 1
              $region61: #{tpu_custom_call.1} parent=47 // loop_footer_branch
                %474 = sbr.rel target = $region57
              $region62: #{tpu_custom_call.1} parent=47 // loop_exit
                _
            $region48: #{tpu_custom_call.1} parent=39 // pred_fallthru
              _
          $region40: #{tpu_custom_call.1} parent=35 // pred_fallthru
            _
          %570 = vnop
        $region36: #{tpu_custom_call.1} parent=31 // pred_fallthru
          _
      $region32: #{tpu_custom_call.1} parent=5 // pred_fallthru
        _
      %p571 = scmp.le.s32.totalorder 2, %s9
      // Predicated region
      $region85: #{tpu_custom_call.1} parent=5 // pred_check
        %p572 = pneg %p571
      $region86: #{tpu_custom_call.1} parent=5 // pred_check_branch
        %574 = sbr.rel (%p572) target = $region88
      $region87: #{tpu_custom_call.1} parent=5 // pred_region
        %s575 = ssub.s32 %s9, 2
        // Predicated region
        $region89: #{tpu_custom_call.1} parent=87 // pred_check
          %p576 = pneg %p106
        $region90: #{tpu_custom_call.1} parent=87 // pred_check_branch
          %578 = sbr.rel (%p576) target = $region92
        $region91: #{tpu_custom_call.1} parent=87 // pred_region
          %s579 = sand.u32 %s91, 1
          %s580 = sand.u32 %s91, 1
          %s581 = smul.addr %s580, 128
          %s582 = scalar_lea.vmem [#allocation2], %s581
        $region92: #{tpu_custom_call.1} parent=87 // pred_fallthru
          _
      $region88: #{tpu_custom_call.1} parent=5 // pred_fallthru
        _
    $region6: #{tpu_custom_call.1} parent=1 // loop_footer
      %s13 = sadd.s32 1, %s9
    $region7: #{tpu_custom_call.1} parent=1 // loop_footer_branch
      %8 = sbr.rel target = $region3
    $region8: #{tpu_custom_call.1} parent=1 // loop_exit
      _

</llo_original>
